<compile_context>
chip_gen: v6e
topology: v6e:2x2x1
jax: 0.10.0
libtpu: 0.0.40
codegen_flags: <defaults>
</compile_context>

<pallas_src>
import numpy as np
import jax
import jax.numpy as jnp
from jax import lax
from jax.experimental import pallas as pl
from jax.experimental.pallas import tpu as pltpu

HIDDEN = 100          # MLP hidden width (mlp_layers=[1, 100, 100, 1])
HID_PAD = 128         # padded to one lane-width
NEG_SLOPE = 0.1       # LeakyReLU(negative_slope=0.1)
TM = 256              # event-tile size (256-aligned for v6e/v7x MXU)
TV = 512              # voxel-column tile size (multiple of 128 -> lane-dense)


def _round_up(n, m):
    return ((n + m - 1) // m) * m


# ----------------------------------------------------------------------------
# Pass 1: ValueLayer MLP per (event, bin)
# ----------------------------------------------------------------------------
def value_kernel(ts_ref, t_ref, w1_ref, b1_ref, w2_ref, b2_ref, w3_ref, b3_ref,
                 vals_ref):
    ts = ts_ref[...]                                        # (TM, 1) shifted times
    # layer 1: K=1 matmul == broadcasted outer product
    h1 = ts * w1_ref[...] + b1_ref[...]                     # (TM, HID_PAD)
    h1 = jnp.where(h1 > 0, h1, NEG_SLOPE * h1)              # LeakyReLU
    # layer 2: MXU matmul (TM x HID_PAD x HID_PAD)
    h2 = jnp.dot(h1, w2_ref[...],
                 preferred_element_type=jnp.float32) + b2_ref[...]
    h2 = jnp.where(h2 > 0, h2, NEG_SLOPE * h2)
    # layer 3 (output width 1): elementwise mul + lane reduce.  The MLP now
    # runs in its own pallas_call, so this VALU work no longer competes with
    # the scatter phase.
    v = jnp.sum(h2 * w3_ref[...], axis=1, keepdims=True) + b3_ref[0, 0]
    vals_ref[...] = t_ref[...] * v                          # values = t * value_layer(.)


# ----------------------------------------------------------------------------
# Pass 2: tiled scatter-add into the flat voxel grid
#   grid = (V_tiles ["parallel"], M_tiles ["arbitrary"/reduction])
#   output block (1, TV) is resident across the M axis (accumulator pattern)
# ----------------------------------------------------------------------------
def scatter_kernel(vals_ref, idx_ref, vox_ref):
    v_i = pl.program_id(0)            # voxel tile
    m_i = pl.program_id(1)            # event tile (reduction axis)

    @pl.when(m_i == 0)
    def _():
        vox_ref[...] = jnp.zeros_like(vox_ref)

    tm = vals_ref.shape[0]
    tv = vox_ref.shape[1]
    col = lax.broadcasted_iota(jnp.int32, (tm, tv), 1) + v_i * tv
    # fused compare + select (no one-hot materialization / extra multiply)
    contrib = jnp.where(col == idx_ref[...], vals_ref[...], 0.0)     # (TM, TV)
    vox_ref[...] += jnp.sum(contrib, axis=0, keepdims=True)          # (1, TV)


# ----------------------------------------------------------------------------
# Wrapper (glue: index arithmetic, padding, reshape/concat)
# ----------------------------------------------------------------------------
def quantization_layer_forward(events, padded_params, dim, batch_size=None):
    C, H, W = dim
    x, y, t, p, b = [events[:, i] for i in range(5)]
    if batch_size is None:
        # TODO(synk): fallback keeps PyTorch semantics (B from events) but
        # forces a device->host sync; prefer passing batch_size statically.
        batch_size = int(np.asarray(jnp.max(events[:, -1]))) + 1
    B = int(batch_size)
    num_voxels = int(2 * C * H * W * B)
    N = events.shape[0]

    bins = jnp.arange(C, dtype=jnp.float32)
    ts = (t[None, :] - bins[:, None] / (C - 1)).reshape(-1)           # (C*N,)
    t_rep = jnp.broadcast_to(t[None, :], (C, N)).reshape(-1)          # (C*N,)
    idx_before = x + W * y + W * H * C * p + W * H * C * 2 * b
    idx = idx_before[None, :] + (W * H) * bins[:, None]
    # clamp(min=0, max=num_voxels-2) matches the PyTorch forward exactly
    idx = jnp.clip(idx, 0, num_voxels - 2).astype(jnp.int32).reshape(-1)

    M = C * N
    M_pad = _round_up(M, TM)
    V_pad = _round_up(num_voxels, TV)
    pad = M_pad - M
    ts_p = jnp.pad(ts, (0, pad)).reshape(M_pad, 1)
    t_p = jnp.pad(t_rep, (0, pad)).reshape(M_pad, 1)
    # padded rows get idx = -1 -> never match any voxel column (explicit mask)
    idx_p = jnp.pad(idx, (0, pad), constant_values=-1).reshape(M_pad, 1)

    w1, b1, w2, b2, w3, b3 = padded_params

    m_tiles = M_pad // TM
    v_tiles = V_pad // TV

    # ---- pass 1: per-(event, bin) MLP values -------------------------------
    vals = pl.pallas_call(
        value_kernel,
        out_shape=jax.ShapeDtypeStruct((M_pad, 1), jnp.float32),
        grid=(m_tiles,),
        in_specs=[
            pl.BlockSpec((TM, 1), lambda m: (m, 0)),             # ts
            pl.BlockSpec((TM, 1), lambda m: (m, 0)),             # t
            pl.BlockSpec((1, HID_PAD), lambda m: (0, 0)),        # w1
            pl.BlockSpec((1, HID_PAD), lambda m: (0, 0)),        # b1
            pl.BlockSpec((HID_PAD, HID_PAD), lambda m: (0, 0)),  # w2
            pl.BlockSpec((1, HID_PAD), lambda m: (0, 0)),        # b2
            pl.BlockSpec((1, HID_PAD), lambda m: (0, 0)),        # w3
            pl.BlockSpec(memory_space=pltpu.MemorySpace.SMEM),   # b3 scalar
        ],
        out_specs=pl.BlockSpec((TM, 1), lambda m: (m, 0)),
        compiler_params=pltpu.CompilerParams(
            dimension_semantics=("parallel",),
            vmem_limit_bytes=16 << 20),
    )(ts_p, t_p, w1, b1, w2, b2, w3, b3)

    # ---- pass 2: tiled scatter-add into the flat voxel grid ----------------
    vox_flat = pl.pallas_call(
        scatter_kernel,
        out_shape=jax.ShapeDtypeStruct((1, V_pad), jnp.float32),
        grid=(v_tiles, m_tiles),
        in_specs=[
            pl.BlockSpec((TM, 1), lambda v, m: (m, 0)),          # vals
            pl.BlockSpec((TM, 1), lambda v, m: (m, 0)),          # idx
        ],
        out_specs=pl.BlockSpec((1, TV), lambda v, m: (0, v)),    # resident over m
        compiler_params=pltpu.CompilerParams(
            dimension_semantics=("parallel", "arbitrary"),
            vmem_limit_bytes=16 << 20),
    )(vals, idx_p)

    vox = vox_flat[0, :num_voxels].reshape(B, 2, C, H, W)
    # torch.cat([vox[:, 0], vox[:, 1]], dim=1)  ->  (B, 2C, H, W)
    vox = jnp.concatenate([vox[:, 0], vox[:, 1]], axis=1)
    return vox


# ----------------------------------------------------------------------------
# Deterministic parameter init (PyTorch-Linear-style uniform bounds)
# ----------------------------------------------------------------------------
def init_value_layer_params(key, hidden=HIDDEN):
    k1, k2, k3, k4, k5, k6 = jax.random.split(key, 6)
    b_in = 1.0                      # fan_in = 1
    b_hid = 1.0 / np.sqrt(hidden)   # fan_in = hidden
    w1 = jax.random.uniform(k1, (1, hidden), jnp.float32, -b_in, b_in)
    b1 = jax.random.uniform(k2, (hidden,), jnp.float32, -b_in, b_in)
    w2 = jax.random.uniform(k3, (hidden, hidden), jnp.float32, -b_hid, b_hid)
    b2 = jax.random.uniform(k4, (hidden,), jnp.float32, -b_hid, b_hid)
    w3 = jax.random.uniform(k5, (hidden,), jnp.float32, -b_hid, b_hid)
    b3 = jax.random.uniform(k6, (1,), jnp.float32, -b_hid, b_hid)
    return w1, b1, w2, b2, w3, b3


def pad_params(raw):
    w1, b1, w2, b2, w3, b3 = raw
    h = w1.shape[1]
    w1p = jnp.zeros((1, HID_PAD), jnp.float32).at[:, :h].set(w1)
    b1p = jnp.zeros((1, HID_PAD), jnp.float32).at[0, :h].set(b1)
    w2p = jnp.zeros((HID_PAD, HID_PAD), jnp.float32).at[:h, :h].set(w2)
    b2p = jnp.zeros((1, HID_PAD), jnp.float32).at[0, :h].set(b2)
    w3p = jnp.zeros((1, HID_PAD), jnp.float32).at[0, :h].set(w3)
    b3p = b3.reshape(1, 1)
    return w1p, b1p, w2p, b2p, w3p, b3p


# ----------------------------------------------------------------------------
# Pure-JAX reference (mirrors the PyTorch forward) for verification
# ----------------------------------------------------------------------------
def _value_layer_ref(x, raw):
    w1, b1, w2, b2, w3, b3 = raw
    h1 = x[:, None] * w1 + b1[None, :]
    h1 = jnp.where(h1 > 0, h1, NEG_SLOPE * h1)
    h2 = h1 @ w2 + b2[None, :]
    h2 = jnp.where(h2 > 0, h2, NEG_SLOPE * h2)
    v = h2 @ w3[:, None] + b3
    return v[:, 0]


def reference_forward(events, raw, dim):
    C, H, W = dim
    x, y, t, p, b = [events[:, i] for i in range(5)]
    B = int(np.asarray(jnp.max(events[:, -1]))) + 1
    num_voxels = int(2 * C * H * W * B)
    vox = jnp.zeros((num_voxels,), jnp.float32)
    idx_before = x + W * y + W * H * C * p + W * H * C * 2 * b
    for i_bin in range(C):
        values = t * _value_layer_ref(t - i_bin / (C - 1), raw)
        idx = jnp.clip(idx_before + W * H * i_bin, 0, num_voxels - 2).astype(jnp.int32)
        vox = vox.at[idx].add(values)
    vox = vox.reshape(B, 2, C, H, W)
    return jnp.concatenate([vox[:, 0], vox[:, 1]], axis=1)


if __name__ == "__main__":
    key = jax.random.PRNGKey(0)
    C, H, W = 4, 16, 16
    dim = (C, H, W)
    N = 64

    kx, ky, kt, kp, kb, kparam = jax.random.split(key, 6)
    ex = jax.random.randint(kx, (N,), 0, W).astype(jnp.float32)
    ey = jax.random.randint(ky, (N,), 0, H).astype(jnp.float32)
    et = jax.random.uniform(kt, (N,), jnp.float32, 0.0, 1.0)
    ep = jax.random.randint(kp, (N,), 0, 2).astype(jnp.float32)
    eb = jax.random.randint(kb, (N,), 0, 2).astype(jnp.float32)
    eb = eb.at[-1].set(1.0)  # guarantee batch size B = 2
    events = jnp.stack([ex, ey, et, ep, eb], axis=1)  # (N, 5): x, y, t, p, b

    raw_params = init_value_layer_params(kparam)
    padded_params = pad_params(raw_params)

    out = quantization_layer_forward(events, padded_params, dim, batch_size=2)
    out = jax.block_until_ready(out)

    ref = reference_forward(events, raw_params, dim)
    assert out.shape == ref.shape == (2, 2 * C, H, W), (out.shape, ref.shape)
    np.testing.assert_allclose(np.asarray(out), np.asarray(ref), rtol=1e-4, atol=1e-4)

    print("KERNEL_OK")
</pallas_src>

<mosaic_0001>
module attributes {stable_mosaic.version = 11 : i64} {
  func.func @value_kernel(%arg0: i32, %arg1: memref<256x1xf32, #tpu.memory_space<vmem>>, %arg2: memref<256x1xf32, #tpu.memory_space<vmem>>, %arg3: memref<1x128xf32, #tpu.memory_space<vmem>>, %arg4: memref<1x128xf32, #tpu.memory_space<vmem>>, %arg5: memref<128x128xf32, #tpu.memory_space<vmem>>, %arg6: memref<1x128xf32, #tpu.memory_space<vmem>>, %arg7: memref<1x128xf32, #tpu.memory_space<vmem>>, %arg8: memref<1x1xf32, #tpu.memory_space<smem>>, %arg9: memref<256x1xf32, #tpu.memory_space<vmem>>) attributes {dimension_semantics = [#tpu.dimension_semantics<parallel>], iteration_bounds = array<i64: 1>, scalar_prefetch = 0 : i64, scratch_operands = 0 : i64, tpu.core_type = #tpu.core_type<tc>, window_params = [{transform_indices = @transform_0, window_bounds = array<i64: 256, 1>}, {transform_indices = @transform_1, window_bounds = array<i64: 256, 1>}, {pipeline_mode = #tpu.pipeline_mode<synchronous>, transform_indices = @transform_2, window_bounds = array<i64: 1, 128>}, {pipeline_mode = #tpu.pipeline_mode<synchronous>, transform_indices = @transform_3, window_bounds = array<i64: 1, 128>}, {pipeline_mode = #tpu.pipeline_mode<synchronous>, transform_indices = @transform_4, window_bounds = array<i64: 128, 128>}, {pipeline_mode = #tpu.pipeline_mode<synchronous>, transform_indices = @transform_5, window_bounds = array<i64: 1, 128>}, {pipeline_mode = #tpu.pipeline_mode<synchronous>, transform_indices = @transform_6, window_bounds = array<i64: 1, 128>}, {transform_indices = @transform_7, window_bounds = array<i64: 1, 1>}, {transform_indices = @transform_8, window_bounds = array<i64: 256, 1>}]} {
    %c0 = arith.constant 0 : index
    %c0_0 = arith.constant 0 : index
    %0 = vector.load %arg1[%c0, %c0_0] : memref<256x1xf32, #tpu.memory_space<vmem>>, vector<256x1xf32>
    %c0_1 = arith.constant 0 : index
    %c0_2 = arith.constant 0 : index
    %1 = vector.load %arg3[%c0_1, %c0_2] : memref<1x128xf32, #tpu.memory_space<vmem>>, vector<1x128xf32>
    %2 = vector.broadcast %0 : vector<256x1xf32> to vector<256x128xf32>
    %3 = vector.broadcast %1 : vector<1x128xf32> to vector<256x128xf32>
    %4 = arith.mulf %2, %3 : vector<256x128xf32>
    %c0_3 = arith.constant 0 : index
    %c0_4 = arith.constant 0 : index
    %5 = vector.load %arg4[%c0_3, %c0_4] : memref<1x128xf32, #tpu.memory_space<vmem>>, vector<1x128xf32>
    %6 = vector.broadcast %5 : vector<1x128xf32> to vector<256x128xf32>
    %7 = arith.addf %4, %6 : vector<256x128xf32>
    %cst = arith.constant 0.000000e+00 : f32
    %8 = vector.broadcast %cst : f32 to vector<256x128xf32>
    %9 = arith.cmpf ogt, %7, %8 : vector<256x128xf32>
    %cst_5 = arith.constant 1.000000e-01 : f32
    %10 = vector.broadcast %cst_5 : f32 to vector<256x128xf32>
    %11 = arith.mulf %10, %7 : vector<256x128xf32>
    %12 = arith.select %9, %7, %11 : vector<256x128xi1>, vector<256x128xf32>
    %c0_6 = arith.constant 0 : index
    %c0_7 = arith.constant 0 : index
    %13 = vector.load %arg5[%c0_6, %c0_7] : memref<128x128xf32, #tpu.memory_space<vmem>>, vector<128x128xf32>
    %cst_8 = arith.constant dense<0.000000e+00> : vector<256x128xf32>
    %14 = tpu.matmul %12, %13, %cst_8 {dimension_numbers = #tpu.dot_dimension_numbers<[1], [0], [0], [1], [0, 0, 1, 1], [], []>} : vector<256x128xf32>, vector<128x128xf32>, vector<256x128xf32> -> vector<256x128xf32>
    %c0_9 = arith.constant 0 : index
    %c0_10 = arith.constant 0 : index
    %15 = vector.load %arg6[%c0_9, %c0_10] : memref<1x128xf32, #tpu.memory_space<vmem>>, vector<1x128xf32>
    %16 = vector.broadcast %15 : vector<1x128xf32> to vector<256x128xf32>
    %17 = arith.addf %14, %16 : vector<256x128xf32>
    %cst_11 = arith.constant 0.000000e+00 : f32
    %18 = vector.broadcast %cst_11 : f32 to vector<256x128xf32>
    %19 = arith.cmpf ogt, %17, %18 : vector<256x128xf32>
    %cst_12 = arith.constant 1.000000e-01 : f32
    %20 = vector.broadcast %cst_12 : f32 to vector<256x128xf32>
    %21 = arith.mulf %20, %17 : vector<256x128xf32>
    %22 = arith.select %19, %17, %21 : vector<256x128xi1>, vector<256x128xf32>
    %c0_13 = arith.constant 0 : index
    %c0_14 = arith.constant 0 : index
    %23 = vector.load %arg7[%c0_13, %c0_14] : memref<1x128xf32, #tpu.memory_space<vmem>>, vector<1x128xf32>
    %24 = vector.broadcast %23 : vector<1x128xf32> to vector<256x128xf32>
    %25 = arith.mulf %22, %24 : vector<256x128xf32>
    %cst_15 = arith.constant dense<0.000000e+00> : vector<256xf32>
    %26 = vector.multi_reduction <add>, %25, %cst_15 [1] : vector<256x128xf32> to vector<256xf32>
    %27 = vector.shape_cast %26 : vector<256xf32> to vector<256x1xf32>
    %c0_16 = arith.constant 0 : index
    %c0_17 = arith.constant 0 : index
    %28 = memref.load %arg8[%c0_16, %c0_17] : memref<1x1xf32, #tpu.memory_space<smem>>
    %29 = vector.broadcast %28 : f32 to vector<256x1xf32>
    %30 = arith.addf %27, %29 : vector<256x1xf32>
    %c0_18 = arith.constant 0 : index
    %c0_19 = arith.constant 0 : index
    %31 = vector.load %arg2[%c0_18, %c0_19] : memref<256x1xf32, #tpu.memory_space<vmem>>, vector<256x1xf32>
    %32 = arith.mulf %31, %30 : vector<256x1xf32>
    %c0_20 = arith.constant 0 : index
    %c0_21 = arith.constant 0 : index
    %33 = vector.load %arg9[%c0_20, %c0_21] : memref<256x1xf32, #tpu.memory_space<vmem>>, vector<256x1xf32>
    tpu.vector_store %arg9[%c0_20, %c0_21], %32 {strides = array<i32>} : memref<256x1xf32, #tpu.memory_space<vmem>>, vector<256x1xf32>,
    return
  }
  func.func @transform_0(%arg0: i32) -> (i32, i32) {
    %c0_i32 = arith.constant 0 : i32
    %c0_i32_0 = arith.constant 0 : i32
    return %arg0, %c0_i32 : i32, i32
  }
  func.func @transform_1(%arg0: i32) -> (i32, i32) {
    %c0_i32 = arith.constant 0 : i32
    %c0_i32_0 = arith.constant 0 : i32
    return %arg0, %c0_i32 : i32, i32
  }
  func.func @transform_2(%arg0: i32) -> (i32, i32) {
    %c0_i32 = arith.constant 0 : i32
    %c0_i32_0 = arith.constant 0 : i32
    %c0_i32_1 = arith.constant 0 : i32
    return %c0_i32, %c0_i32_0 : i32, i32
  }
  func.func @transform_3(%arg0: i32) -> (i32, i32) {
    %c0_i32 = arith.constant 0 : i32
    %c0_i32_0 = arith.constant 0 : i32
    %c0_i32_1 = arith.constant 0 : i32
    return %c0_i32, %c0_i32_0 : i32, i32
  }
  func.func @transform_4(%arg0: i32) -> (i32, i32) {
    %c0_i32 = arith.constant 0 : i32
    %c0_i32_0 = arith.constant 0 : i32
    %c0_i32_1 = arith.constant 0 : i32
    return %c0_i32, %c0_i32_0 : i32, i32
  }
  func.func @transform_5(%arg0: i32) -> (i32, i32) {
    %c0_i32 = arith.constant 0 : i32
    %c0_i32_0 = arith.constant 0 : i32
    %c0_i32_1 = arith.constant 0 : i32
    return %c0_i32, %c0_i32_0 : i32, i32
  }
  func.func @transform_6(%arg0: i32) -> (i32, i32) {
    %c0_i32 = arith.constant 0 : i32
    %c0_i32_0 = arith.constant 0 : i32
    %c0_i32_1 = arith.constant 0 : i32
    return %c0_i32, %c0_i32_0 : i32, i32
  }
  func.func @transform_7(%arg0: i32) -> (i32, i32) {
    %c0_i32 = arith.constant 0 : i32
    %c0_i32_0 = arith.constant 0 : i32
    %c0_i32_1 = arith.constant 0 : i32
    return %c0_i32, %c0_i32_0 : i32, i32
  }
  func.func @transform_8(%arg0: i32) -> (i32, i32) {
    %c0_i32 = arith.constant 0 : i32
    %c0_i32_0 = arith.constant 0 : i32
    return %arg0, %c0_i32 : i32, i32
  }
}

</mosaic_0001>

<llo_original>
// kernel: tpu_custom_call.1
$region0: #{tpu_custom_call.1}
  #allocation0 [shape = 'u32[]', space=smem, size = 0x4, offset = 0x4, fixed_abs, tag = 'smem constant byte address 0x4 - core index']
  #allocation1 [shape = 'u32[144,128]{1,0:T(1,128)}', space=vmem, size = 0x12000, scoped, tag = 'internal scratch']
  #allocation2 [shape = 'f32[1,1]{1,0:T(1,128)S(6)}', space=smem, size = 0x200, scoped, tag = 'scoped memory for tpu_custom_call.1']
  %s0 = inlined_call_operand.vmem [shape: f32[256,1], index: 0, kind: input, shape index: {}]
  %s1 = inlined_call_operand.vmem [shape: f32[256,1], index: 1, kind: input, shape index: {}]
  %s2 = inlined_call_operand.vmem [shape: f32[1,128], index: 2, kind: input, shape index: {}]
  %s3 = inlined_call_operand.vmem [shape: f32[1,128], index: 3, kind: input, shape index: {}]
  %s4 = inlined_call_operand.vmem [shape: f32[128,128], index: 4, kind: input, shape index: {}]
  %s5 = inlined_call_operand.vmem [shape: f32[1,128], index: 5, kind: input, shape index: {}]
  %s6 = inlined_call_operand.vmem [shape: f32[1,128], index: 6, kind: input, shape index: {}]
  %s7 = inlined_call_operand.<no memory space> [shape: f32[1,1], index: 7, kind: input, shape index: {}]
  %s8 = inlined_call_operand.vmem [shape: f32[256,1], index: 8, kind: output, shape index: {}]
  %s9 = sld [smem:[#allocation0]]
  $region42: #{tpu_custom_call.1} parent=0
    _
  %s11 = ssub.s32 1, %s9
  %s12 = scalar_select 0, %s11, %s9
  %13 = sst [smem:[#allocation2]] %s7
  // Predicated region
  $region2: #{tpu_custom_call.1} parent=0 // pred_check
    _
  $region3: #{tpu_custom_call.1} parent=0 // pred_check_branch
    %15 = sbr.rel (0) target = $region5
  $region4: #{tpu_custom_call.1} parent=0 // pred_region
    _
  $region5: #{tpu_custom_call.1} parent=0 // pred_fallthru
    _
  // Predicated region
  $region6: #{tpu_custom_call.1} parent=0 // pred_check
    _
  $region7: #{tpu_custom_call.1} parent=0 // pred_check_branch
    %17 = sbr.rel (0) target = $region9
  $region8: #{tpu_custom_call.1} parent=0 // pred_region
    _
  $region9: #{tpu_custom_call.1} parent=0 // pred_fallthru
    _
  // Predicated region
  $region10: #{tpu_custom_call.1} parent=0 // pred_check
    _
  $region11: #{tpu_custom_call.1} parent=0 // pred_check_branch
    %19 = sbr.rel (0) target = $region13
  $region12: #{tpu_custom_call.1} parent=0 // pred_region
    _
  $region13: #{tpu_custom_call.1} parent=0 // pred_fallthru
    _
  // Predicated region
  $region14: #{tpu_custom_call.1} parent=0 // pred_check
    _
  $region15: #{tpu_custom_call.1} parent=0 // pred_check_branch
    %21 = sbr.rel (0) target = $region17
  $region16: #{tpu_custom_call.1} parent=0 // pred_region
    _
  $region17: #{tpu_custom_call.1} parent=0 // pred_fallthru
    _
  // Predicated region
  $region18: #{tpu_custom_call.1} parent=0 // pred_check
    _
  $region19: #{tpu_custom_call.1} parent=0 // pred_check_branch
    %23 = sbr.rel (0) target = $region21
  $region20: #{tpu_custom_call.1} parent=0 // pred_region
    _
  $region21: #{tpu_custom_call.1} parent=0 // pred_fallthru
    _
  // Predicated region
  $region22: #{tpu_custom_call.1} parent=0 // pred_check
    _
  $region23: #{tpu_custom_call.1} parent=0 // pred_check_branch
    %25 = sbr.rel (0) target = $region25
  $region24: #{tpu_custom_call.1} parent=0 // pred_region
    _
  $region25: #{tpu_custom_call.1} parent=0 // pred_fallthru
    _
  // Predicated region
  $region26: #{tpu_custom_call.1} parent=0 // pred_check
    _
  $region27: #{tpu_custom_call.1} parent=0 // pred_check_branch
    %27 = sbr.rel (0) target = $region29
  $region28: #{tpu_custom_call.1} parent=0 // pred_region
    _
  $region29: #{tpu_custom_call.1} parent=0 // pred_fallthru
    _
  // Predicated region
  $region30: #{tpu_custom_call.1} parent=0 // pred_check
    _
  $region31: #{tpu_custom_call.1} parent=0 // pred_check_branch
    %29 = sbr.rel (0) target = $region33
  $region32: #{tpu_custom_call.1} parent=0 // pred_region
    _
  $region33: #{tpu_custom_call.1} parent=0 // pred_fallthru
    _
  %v30 = vld [vmem:[%s0] sm:$0xff]
  %v31 = vld [vmem:[%s0 + $0x8] sm:$0xff]
  %v32 = vld [vmem:[%s0 + $0x10] sm:$0xff]
  %v33 = vld [vmem:[%s0 + $0x18] sm:$0xff]
  %v34 = vld [vmem:[%s0 + $0x20] sm:$0xff]
  %v35 = vld [vmem:[%s0 + $0x28] sm:$0xff]
  %v36 = vld [vmem:[%s0 + $0x30] sm:$0xff]
  %v37 = vld [vmem:[%s0 + $0x38] sm:$0xff]
  %v38 = vld [vmem:[%s0 + $0x40] sm:$0xff]
  %v39 = vld [vmem:[%s0 + $0x48] sm:$0xff]
  %v40 = vld [vmem:[%s0 + $0x50] sm:$0xff]
  %v41 = vld [vmem:[%s0 + $0x58] sm:$0xff]
  %v42 = vld [vmem:[%s0 + $0x60] sm:$0xff]
  %v43 = vld [vmem:[%s0 + $0x68] sm:$0xff]
  %v44 = vld [vmem:[%s0 + $0x70] sm:$0xff]
  %v45 = vld [vmem:[%s0 + $0x78] sm:$0xff]
  %v46 = vld [vmem:[%s0 + $0x80] sm:$0xff]
  %v47 = vld [vmem:[%s0 + $0x88] sm:$0xff]
  %v48 = vld [vmem:[%s0 + $0x90] sm:$0xff]
  %v49 = vld [vmem:[%s0 + $0x98] sm:$0xff]
  %v50 = vld [vmem:[%s0 + $0xa0] sm:$0xff]
  %v51 = vld [vmem:[%s0 + $0xa8] sm:$0xff]
  %v52 = vld [vmem:[%s0 + $0xb0] sm:$0xff]
  %v53 = vld [vmem:[%s0 + $0xb8] sm:$0xff]
  %v54 = vld [vmem:[%s0 + $0xc0] sm:$0xff]
  %v55 = vld [vmem:[%s0 + $0xc8] sm:$0xff]
  %v56 = vld [vmem:[%s0 + $0xd0] sm:$0xff]
  %v57 = vld [vmem:[%s0 + $0xd8] sm:$0xff]
  %v58 = vld [vmem:[%s0 + $0xe0] sm:$0xff]
  %v59 = vld [vmem:[%s0 + $0xe8] sm:$0xff]
  %v60 = vld [vmem:[%s0 + $0xf0] sm:$0xff]
  %v61 = vld [vmem:[%s0 + $0xf8] sm:$0xff]
  %v62 = vld [vmem:[%s2] sm:$0x1]
  %64 = vset.pattern.permute.xlu0 0
  %65 = vperm.xlu0 %64, %v30
  %v66 = vpop.permute.xlu0 %65
  %69 = vset.pattern.permute.xlu0 0
  %70 = vperm.xlu0 %69, %v31
  %v71 = vpop.permute.xlu0 %70
  %74 = vset.pattern.permute.xlu0 0
  %75 = vperm.xlu0 %74, %v32
  %v76 = vpop.permute.xlu0 %75
  %79 = vset.pattern.permute.xlu0 0
  %80 = vperm.xlu0 %79, %v33
  %v81 = vpop.permute.xlu0 %80
  %84 = vset.pattern.permute.xlu0 0
  %85 = vperm.xlu0 %84, %v34
  %v86 = vpop.permute.xlu0 %85
  %89 = vset.pattern.permute.xlu0 0
  %90 = vperm.xlu0 %89, %v35
  %v91 = vpop.permute.xlu0 %90
  %94 = vset.pattern.permute.xlu0 0
  %95 = vperm.xlu0 %94, %v36
  %v96 = vpop.permute.xlu0 %95
  %99 = vset.pattern.permute.xlu0 0
  %100 = vperm.xlu0 %99, %v37
  %v101 = vpop.permute.xlu0 %100
  %104 = vset.pattern.permute.xlu0 0
  %105 = vperm.xlu0 %104, %v38
  %v106 = vpop.permute.xlu0 %105
  %109 = vset.pattern.permute.xlu0 0
  %110 = vperm.xlu0 %109, %v39
  %v111 = vpop.permute.xlu0 %110
  %114 = vset.pattern.permute.xlu0 0
  %115 = vperm.xlu0 %114, %v40
  %v116 = vpop.permute.xlu0 %115
  %119 = vset.pattern.permute.xlu0 0
  %120 = vperm.xlu0 %119, %v41
  %v121 = vpop.permute.xlu0 %120
  %124 = vset.pattern.permute.xlu0 0
  %125 = vperm.xlu0 %124, %v42
  %v126 = vpop.permute.xlu0 %125
  %129 = vset.pattern.permute.xlu0 0
  %130 = vperm.xlu0 %129, %v43
  %v131 = vpop.permute.xlu0 %130
  %134 = vset.pattern.permute.xlu0 0
  %135 = vperm.xlu0 %134, %v44
  %v136 = vpop.permute.xlu0 %135
  %139 = vset.pattern.permute.xlu0 0
  %140 = vperm.xlu0 %139, %v45
  %v141 = vpop.permute.xlu0 %140
  %144 = vset.pattern.permute.xlu0 0
  %145 = vperm.xlu0 %144, %v46
  %v146 = vpop.permute.xlu0 %145
  %149 = vset.pattern.permute.xlu0 0
  %150 = vperm.xlu0 %149, %v47
  %v151 = vpop.permute.xlu0 %150
  %154 = vset.pattern.permute.xlu0 0
  %155 = vperm.xlu0 %154, %v48
  %v156 = vpop.permute.xlu0 %155
  %159 = vset.pattern.permute.xlu0 0
  %160 = vperm.xlu0 %159, %v49
  %v161 = vpop.permute.xlu0 %160
  %164 = vset.pattern.permute.xlu0 0
  %165 = vperm.xlu0 %164, %v50
  %v166 = vpop.permute.xlu0 %165
  %169 = vset.pattern.permute.xlu0 0
  %170 = vperm.xlu0 %169, %v51
  %v171 = vpop.permute.xlu0 %170
  %174 = vset.pattern.permute.xlu0 0
  %175 = vperm.xlu0 %174, %v52
  %v176 = vpop.permute.xlu0 %175
  %179 = vset.pattern.permute.xlu0 0
  %180 = vperm.xlu0 %179, %v53
  %v181 = vpop.permute.xlu0 %180
  %184 = vset.pattern.permute.xlu0 0
  %185 = vperm.xlu0 %184, %v54
  %v186 = vpop.permute.xlu0 %185
  %189 = vset.pattern.permute.xlu0 0
  %190 = vperm.xlu0 %189, %v55
  %v191 = vpop.permute.xlu0 %190
  %194 = vset.pattern.permute.xlu0 0
  %195 = vperm.xlu0 %194, %v56
  %v196 = vpop.permute.xlu0 %195
  %199 = vset.pattern.permute.xlu0 0
  %200 = vperm.xlu0 %199, %v57
  %v201 = vpop.permute.xlu0 %200
  %204 = vset.pattern.permute.xlu0 0
  %205 = vperm.xlu0 %204, %v58
  %v206 = vpop.permute.xlu0 %205
  %209 = vset.pattern.permute.xlu0 0
  %210 = vperm.xlu0 %209, %v59
  %v211 = vpop.permute.xlu0 %210
  %214 = vset.pattern.permute.xlu0 0
  %215 = vperm.xlu0 %214, %v60
  %v216 = vpop.permute.xlu0 %215
  %219 = vset.pattern.permute.xlu0 0
  %220 = vperm.xlu0 %219, %v61
  %v221 = vpop.permute.xlu0 %220
  %v224 = vlaneseq
  %v225 = vshrl.u32 %v224, 7
  %v226 = vsub.s32 0, %v225
  %v227 = vrot.slane %v62, %v226
  %v229 = vmul.f32 %v66, %v227
  %v230 = vmul.f32 %v71, %v227
  %v231 = vmul.f32 %v76, %v227
  %v232 = vmul.f32 %v81, %v227
  %v233 = vmul.f32 %v86, %v227
  %v234 = vmul.f32 %v91, %v227
  %v235 = vmul.f32 %v96, %v227
  %v236 = vmul.f32 %v101, %v227
  %v237 = vmul.f32 %v106, %v227
  %v238 = vmul.f32 %v111, %v227
  %v239 = vmul.f32 %v116, %v227
  %v240 = vmul.f32 %v121, %v227
  %v241 = vmul.f32 %v126, %v227
  %v242 = vmul.f32 %v131, %v227
  %v243 = vmul.f32 %v136, %v227
  %v244 = vmul.f32 %v141, %v227
  %v245 = vmul.f32 %v146, %v227
  %v246 = vmul.f32 %v151, %v227
  %v247 = vmul.f32 %v156, %v227
  %v248 = vmul.f32 %v161, %v227
  %v249 = vmul.f32 %v166, %v227
  %v250 = vmul.f32 %v171, %v227
  %v251 = vmul.f32 %v176, %v227
  %v252 = vmul.f32 %v181, %v227
  %v253 = vmul.f32 %v186, %v227
  %v254 = vmul.f32 %v191, %v227
  %v255 = vmul.f32 %v196, %v227
  %v256 = vmul.f32 %v201, %v227
  %v257 = vmul.f32 %v206, %v227
  %v258 = vmul.f32 %v211, %v227
  %v259 = vmul.f32 %v216, %v227
  %v260 = vmul.f32 %v221, %v227
  %v261 = vld [vmem:[%s3] sm:$0x1]
  %v263 = vlaneseq
  %v264 = vshrl.u32 %v263, 7
  %v265 = vsub.s32 0, %v264
  %v266 = vrot.slane %v261, %v265
  %v268 = vadd.f32 %v229, %v266
  %v269 = vadd.f32 %v230, %v266
  %v270 = vadd.f32 %v231, %v266
  %v271 = vadd.f32 %v232, %v266
  %v272 = vadd.f32 %v233, %v266
  %v273 = vadd.f32 %v234, %v266
  %v274 = vadd.f32 %v235, %v266
  %v275 = vadd.f32 %v236, %v266
  %v276 = vadd.f32 %v237, %v266
  %v277 = vadd.f32 %v238, %v266
  %v278 = vadd.f32 %v239, %v266
  %v279 = vadd.f32 %v240, %v266
  %v280 = vadd.f32 %v241, %v266
  %v281 = vadd.f32 %v242, %v266
  %v282 = vadd.f32 %v243, %v266
  %v283 = vadd.f32 %v244, %v266
  %v284 = vadd.f32 %v245, %v266
  %v285 = vadd.f32 %v246, %v266
  %v286 = vadd.f32 %v247, %v266
  %v287 = vadd.f32 %v248, %v266
  %v288 = vadd.f32 %v249, %v266
  %v289 = vadd.f32 %v250, %v266
  %v290 = vadd.f32 %v251, %v266
  %v291 = vadd.f32 %v252, %v266
  %v292 = vadd.f32 %v253, %v266
  %v293 = vadd.f32 %v254, %v266
  %v294 = vadd.f32 %v255, %v266
  %v295 = vadd.f32 %v256, %v266
  %v296 = vadd.f32 %v257, %v266
  %v297 = vadd.f32 %v258, %v266
  %v298 = vadd.f32 %v259, %v266
  %v299 = vadd.f32 %v260, %v266
  %vm300 = vcmp.gt.f32.partialorder %v268, 0.0
  %vm301 = vcmp.gt.f32.partialorder %v269, 0.0
  %vm302 = vcmp.gt.f32.partialorder %v270, 0.0
  %vm303 = vcmp.gt.f32.partialorder %v271, 0.0
  %vm304 = vcmp.gt.f32.partialorder %v272, 0.0
  %vm305 = vcmp.gt.f32.partialorder %v273, 0.0
  %vm306 = vcmp.gt.f32.partialorder %v274, 0.0
  %vm307 = vcmp.gt.f32.partialorder %v275, 0.0
  %vm308 = vcmp.gt.f32.partialorder %v276, 0.0
  %vm309 = vcmp.gt.f32.partialorder %v277, 0.0
  %vm310 = vcmp.gt.f32.partialorder %v278, 0.0
  %vm311 = vcmp.gt.f32.partialorder %v279, 0.0
  %vm312 = vcmp.gt.f32.partialorder %v280, 0.0
  %vm313 = vcmp.gt.f32.partialorder %v281, 0.0
  %vm314 = vcmp.gt.f32.partialorder %v282, 0.0
  %vm315 = vcmp.gt.f32.partialorder %v283, 0.0
  %vm316 = vcmp.gt.f32.partialorder %v284, 0.0
  %vm317 = vcmp.gt.f32.partialorder %v285, 0.0
  %vm318 = vcmp.gt.f32.partialorder %v286, 0.0
  %vm319 = vcmp.gt.f32.partialorder %v287, 0.0
  %vm320 = vcmp.gt.f32.partialorder %v288, 0.0
  %vm321 = vcmp.gt.f32.partialorder %v289, 0.0
  %vm322 = vcmp.gt.f32.partialorder %v290, 0.0
  %vm323 = vcmp.gt.f32.partialorder %v291, 0.0
  %vm324 = vcmp.gt.f32.partialorder %v292, 0.0
  %vm325 = vcmp.gt.f32.partialorder %v293, 0.0
  %vm326 = vcmp.gt.f32.partialorder %v294, 0.0
  %vm327 = vcmp.gt.f32.partialorder %v295, 0.0
  %vm328 = vcmp.gt.f32.partialorder %v296, 0.0
  %vm329 = vcmp.gt.f32.partialorder %v297, 0.0
  %vm330 = vcmp.gt.f32.partialorder %v298, 0.0
  %vm331 = vcmp.gt.f32.partialorder %v299, 0.0
  %v332 = vmul.f32 %v268, 0.1
  %v333 = vmul.f32 %v269, 0.1
  %v334 = vmul.f32 %v270, 0.1
  %v335 = vmul.f32 %v271, 0.1
  %v336 = vmul.f32 %v272, 0.1
  %v337 = vmul.f32 %v273, 0.1
  %v338 = vmul.f32 %v274, 0.1
  %v339 = vmul.f32 %v275, 0.1
  %v340 = vmul.f32 %v276, 0.1
  %v341 = vmul.f32 %v277, 0.1
  %v342 = vmul.f32 %v278, 0.1
  %v343 = vmul.f32 %v279, 0.1
  %v344 = vmul.f32 %v280, 0.1
  %v345 = vmul.f32 %v281, 0.1
  %v346 = vmul.f32 %v282, 0.1
  %v347 = vmul.f32 %v283, 0.1
  %v348 = vmul.f32 %v284, 0.1
  %v349 = vmul.f32 %v285, 0.1
  %v350 = vmul.f32 %v286, 0.1
  %v351 = vmul.f32 %v287, 0.1
  %v352 = vmul.f32 %v288, 0.1
  %v353 = vmul.f32 %v289, 0.1
  %v354 = vmul.f32 %v290, 0.1
  %v355 = vmul.f32 %v291, 0.1
  %v356 = vmul.f32 %v292, 0.1
  %v357 = vmul.f32 %v293, 0.1
  %v358 = vmul.f32 %v294, 0.1
  %v359 = vmul.f32 %v295, 0.1
  %v360 = vmul.f32 %v296, 0.1
  %v361 = vmul.f32 %v297, 0.1
  %v362 = vmul.f32 %v298, 0.1
  %v363 = vmul.f32 %v299, 0.1
  %v364 = vsel %vm300, %v268, %v332
  %v365 = vsel %vm301, %v269, %v333
  %v366 = vsel %vm302, %v270, %v334
  %v367 = vsel %vm303, %v271, %v335
  %v368 = vsel %vm304, %v272, %v336
  %v369 = vsel %vm305, %v273, %v337
  %v370 = vsel %vm306, %v274, %v338
  %v371 = vsel %vm307, %v275, %v339
  %v372 = vsel %vm308, %v276, %v340
  %v373 = vsel %vm309, %v277, %v341
  %v374 = vsel %vm310, %v278, %v342
  %v375 = vsel %vm311, %v279, %v343
  %v376 = vsel %vm312, %v280, %v344
  %v377 = vsel %vm313, %v281, %v345
  %v378 = vsel %vm314, %v282, %v346
  %v379 = vsel %vm315, %v283, %v347
  %v380 = vsel %vm316, %v284, %v348
  %v381 = vsel %vm317, %v285, %v349
  %v382 = vsel %vm318, %v286, %v350
  %v383 = vsel %vm319, %v287, %v351
  %v384 = vsel %vm320, %v288, %v352
  %v385 = vsel %vm321, %v289, %v353
  %v386 = vsel %vm322, %v290, %v354
  %v387 = vsel %vm323, %v291, %v355
  %v388 = vsel %vm324, %v292, %v356
  %v389 = vsel %vm325, %v293, %v357
  %v390 = vsel %vm326, %v294, %v358
  %v391 = vsel %vm327, %v295, %v359
  %v392 = vsel %vm328, %v296, %v360
  %v393 = vsel %vm329, %v297, %v361
  %v394 = vsel %vm330, %v298, %v362
  %v395 = vsel %vm331, %v299, %v363
  %v396 = vld [vmem:[%s4] sm:$0xff]
  %v397 = vld [vmem:[%s4 + $0x8] sm:$0xff]
  %v398 = vld [vmem:[%s4 + $0x10] sm:$0xff]
  %v399 = vld [vmem:[%s4 + $0x18] sm:$0xff]
  %v400 = vld [vmem:[%s4 + $0x20] sm:$0xff]
  %v401 = vld [vmem:[%s4 + $0x28] sm:$0xff]
  %v402 = vld [vmem:[%s4 + $0x30] sm:$0xff]
  %v403 = vld [vmem:[%s4 + $0x38] sm:$0xff]
  %v404 = vld [vmem:[%s4 + $0x40] sm:$0xff]
  %v405 = vld [vmem:[%s4 + $0x48] sm:$0xff]
  %v406 = vld [vmem:[%s4 + $0x50] sm:$0xff]
  %v407 = vld [vmem:[%s4 + $0x58] sm:$0xff]
  %v408 = vld [vmem:[%s4 + $0x60] sm:$0xff]
  %v409 = vld [vmem:[%s4 + $0x68] sm:$0xff]
  %v410 = vld [vmem:[%s4 + $0x70] sm:$0xff]
  %v411 = vld [vmem:[%s4 + $0x78] sm:$0xff]
  %v412 = vld [vmem:[%s5] sm:$0x1]
  %v414 = vlaneseq
  %v415 = vshrl.u32 %v414, 7
  %v416 = vsub.s32 0, %v415
  %v417 = vrot.slane %v412, %v416
  %419 = vmatprep.subr.mxu0 0.0
  %420 = vmatpush1.msra.mxu0 %v411
  %421 = vmatprep.subr.mxu0 0.0
  %422 = vmatpush1.msra.mxu0 %v410
  %423 = vmatprep.subr.mxu0 0.0
  %424 = vmatpush1.msra.mxu0 %v409
  %425 = vmatprep.subr.mxu0 0.0
  %426 = vmatpush1.msra.mxu0 %v408
  %427 = vmatprep.subr.mxu0 0.0
  %428 = vmatpush1.msra.mxu0 %v407
  %429 = vmatprep.subr.mxu0 0.0
  %430 = vmatpush1.msra.mxu0 %v406
  %431 = vmatprep.subr.mxu0 0.0
  %432 = vmatpush1.msra.mxu0 %v405
  %433 = vmatprep.subr.mxu0 0.0
  %434 = vmatpush1.msra.mxu0 %v404
  %435 = vmatprep.subr.mxu0 0.0
  %436 = vmatpush1.msra.mxu0 %v403
  %437 = vmatprep.subr.mxu0 0.0
  %438 = vmatpush1.msra.mxu0 %v402
  %439 = vmatprep.subr.mxu0 0.0
  %440 = vmatpush1.msra.mxu0 %v401
  %441 = vmatprep.subr.mxu0 0.0
  %442 = vmatpush1.msra.mxu0 %v400
  %443 = vmatprep.subr.mxu0 0.0
  %444 = vmatpush1.msra.mxu0 %v399
  %445 = vmatprep.subr.mxu0 0.0
  %446 = vmatpush1.msra.mxu0 %v398
  %447 = vmatprep.subr.mxu0 0.0
  %448 = vmatpush1.msra.mxu0 %v397
  %449 = vmatprep.subr.mxu0 0.0
  %450 = vmatpush1.msra.mxu0 %v396
  %451 = vmatprep.subr.mxu0 0.0
  %452 = vmatpush2.msra.mxu0 0.0
  %453 = vmatprep.subr.mxu0 0.0
  %454 = vmatpush2.msra.mxu0 0.0
  %455 = vmatprep.subr.mxu0 0.0
  %456 = vmatpush2.msra.mxu0 0.0
  %457 = vmatprep.subr.mxu0 0.0
  %458 = vmatpush2.msra.mxu0 0.0
  %459 = vmatprep.subr.mxu0 0.0
  %460 = vmatpush2.msra.mxu0 0.0
  %461 = vmatprep.subr.mxu0 0.0
  %462 = vmatpush2.msra.mxu0 0.0
  %463 = vmatprep.subr.mxu0 0.0
  %464 = vmatpush2.msra.mxu0 0.0
  %465 = vmatprep.subr.mxu0 0.0
  %466 = vmatpush2.msra.mxu0 0.0
  %467 = vmatprep.subr.mxu0 0.0
  %468 = vmatpush2.msra.mxu0 0.0
  %469 = vmatprep.subr.mxu0 0.0
  %470 = vmatpush2.msra.mxu0 0.0
  %471 = vmatprep.subr.mxu0 0.0
  %472 = vmatpush2.msra.mxu0 0.0
  %473 = vmatprep.subr.mxu0 0.0
  %474 = vmatpush2.msra.mxu0 0.0
  %475 = vmatprep.subr.mxu0 0.0
  %476 = vmatpush2.msra.mxu0 0.0
  %477 = vmatprep.subr.mxu0 0.0
  %478 = vmatpush2.msra.mxu0 0.0
  %479 = vmatprep.subr.mxu0 0.0
  %480 = vmatpush2.msra.mxu0 0.0
  %481 = vmatprep.subr.mxu0 0.0
  %482 = vmatpush2.msra.mxu0 0.0
  %483 = vmatprep.mubr.f32.mxu0 0.0
  %484 = vmatmul.mubr.f32.gmra.mxu0 %v364
  %v485 = vpop.f32.mrf.mxu0
  %v486 = vadd.f32 %v417, %v485
  %v487 = vpop.f32.mrf.mxu0
  %488 = vmatprep.mubr.f32.mxu0 0.0
  %489 = vmatmul.mubr.f32.gmra.mxu0 %v365
  %v490 = vpop.f32.mrf.mxu0
  %v491 = vadd.f32 %v417, %v490
  %v492 = vpop.f32.mrf.mxu0
  %493 = vmatprep.mubr.f32.mxu0 0.0
  %494 = vmatmul.mubr.f32.gmra.mxu0 %v366
  %v495 = vpop.f32.mrf.mxu0
  %v496 = vadd.f32 %v417, %v495
  %v497 = vpop.f32.mrf.mxu0
  %498 = vmatprep.mubr.f32.mxu0 0.0
  %499 = vmatmul.mubr.f32.gmra.mxu0 %v367
  %v500 = vpop.f32.mrf.mxu0
  %v501 = vadd.f32 %v417, %v500
  %v502 = vpop.f32.mrf.mxu0
  %503 = vmatprep.mubr.f32.mxu0 0.0
  %504 = vmatmul.mubr.f32.gmra.mxu0 %v368
  %v505 = vpop.f32.mrf.mxu0
  %v506 = vadd.f32 %v417, %v505
  %v507 = vpop.f32.mrf.mxu0
  %508 = vmatprep.mubr.f32.mxu0 0.0
  %509 = vmatmul.mubr.f32.gmra.mxu0 %v369
  %v510 = vpop.f32.mrf.mxu0
  %v511 = vadd.f32 %v417, %v510
  %v512 = vpop.f32.mrf.mxu0
  %513 = vmatprep.mubr.f32.mxu0 0.0
  %514 = vmatmul.mubr.f32.gmra.mxu0 %v370
  %v515 = vpop.f32.mrf.mxu0
  %v516 = vadd.f32 %v417, %v515
  %v517 = vpop.f32.mrf.mxu0
  %518 = vmatprep.mubr.f32.mxu0 0.0
  %519 = vmatmul.mubr.f32.gmra.mxu0 %v371
  %v520 = vpop.f32.mrf.mxu0
  %v521 = vadd.f32 %v417, %v520
  %v522 = vpop.f32.mrf.mxu0
  %523 = vmatprep.mubr.f32.mxu0 0.0
  %524 = vmatmul.mubr.f32.gmra.mxu0 %v372
  %v525 = vpop.f32.mrf.mxu0
  %v526 = vadd.f32 %v417, %v525
  %v527 = vpop.f32.mrf.mxu0
  %528 = vmatprep.mubr.f32.mxu0 0.0
  %529 = vmatmul.mubr.f32.gmra.mxu0 %v373
  %v530 = vpop.f32.mrf.mxu0
  %v531 = vadd.f32 %v417, %v530
  %v532 = vpop.f32.mrf.mxu0
  %533 = vmatprep.mubr.f32.mxu0 0.0
  %534 = vmatmul.mubr.f32.gmra.mxu0 %v374
  %v535 = vpop.f32.mrf.mxu0
  %v536 = vadd.f32 %v417, %v535
  %v537 = vpop.f32.mrf.mxu0
  %538 = vmatprep.mubr.f32.mxu0 0.0
  %539 = vmatmul.mubr.f32.gmra.mxu0 %v375
  %v540 = vpop.f32.mrf.mxu0
  %v541 = vadd.f32 %v417, %v540
  %v542 = vpop.f32.mrf.mxu0
  %543 = vmatprep.mubr.f32.mxu0 0.0
  %544 = vmatmul.mubr.f32.gmra.mxu0 %v376
  %v545 = vpop.f32.mrf.mxu0
  %v546 = vadd.f32 %v417, %v545
  %v547 = vpop.f32.mrf.mxu0
  %548 = vmatprep.mubr.f32.mxu0 0.0
  %549 = vmatmul.mubr.f32.gmra.mxu0 %v377
  %v550 = vpop.f32.mrf.mxu0
  %v551 = vadd.f32 %v417, %v550
  %v552 = vpop.f32.mrf.mxu0
  %553 = vmatprep.mubr.f32.mxu0 0.0
  %554 = vmatmul.mubr.f32.gmra.mxu0 %v378
  %v555 = vpop.f32.mrf.mxu0
  %v556 = vadd.f32 %v417, %v555
  %v557 = vpop.f32.mrf.mxu0
  %558 = vmatprep.mubr.f32.mxu0 0.0
  %559 = vmatmul.mubr.f32.gmra.mxu0 %v379
  %v560 = vpop.f32.mrf.mxu0
  %v561 = vadd.f32 %v417, %v560
  %v562 = vpop.f32.mrf.mxu0
  %563 = vmatprep.mubr.f32.mxu0 0.0
  %564 = vmatmul.mubr.f32.gmra.mxu0 %v380
  %v565 = vpop.f32.mrf.mxu0
  %v566 = vadd.f32 %v417, %v565
  %v567 = vpop.f32.mrf.mxu0
  %568 = vmatprep.mubr.f32.mxu0 0.0
  %569 = vmatmul.mubr.f32.gmra.mxu0 %v381
  %v570 = vpop.f32.mrf.mxu0
  %v571 = vadd.f32 %v417, %v570
  %v572 = vpop.f32.mrf.mxu0
  %573 = vmatprep.mubr.f32.mxu0 0.0
  %574 = vmatmul.mubr.f32.gmra.mxu0 %v382
  %v575 = vpop.f32.mrf.mxu0
  %v576 = vadd.f32 %v417, %v575
  %v577 = vpop.f32.mrf.mxu0
  %578 = vmatprep.mubr.f32.mxu0 0.0
  %579 = vmatmul.mubr.f32.gmra.mxu0 %v383
  %v580 = vpop.f32.mrf.mxu0
  %v581 = vadd.f32 %v417, %v580
  %v582 = vpop.f32.mrf.mxu0
  %583 = vmatprep.mubr.f32.mxu0 0.0
  %584 = vmatmul.mubr.f32.gmra.mxu0 %v384
  %v585 = vpop.f32.mrf.mxu0
  %v586 = vadd.f32 %v417, %v585
  %v587 = vpop.f32.mrf.mxu0
  %588 = vmatprep.mubr.f32.mxu0 0.0
  %589 = vmatmul.mubr.f32.gmra.mxu0 %v385
  %v590 = vpop.f32.mrf.mxu0
  %v591 = vadd.f32 %v417, %v590
  %v592 = vpop.f32.mrf.mxu0
  %593 = vmatprep.mubr.f32.mxu0 0.0
  %594 = vmatmul.mubr.f32.gmra.mxu0 %v386
  %v595 = vpop.f32.mrf.mxu0
  %v596 = vadd.f32 %v417, %v595
  %v597 = vpop.f32.mrf.mxu0
  %598 = vmatprep.mubr.f32.mxu0 0.0
  %599 = vmatmul.mubr.f32.gmra.mxu0 %v387
  %v600 = vpop.f32.mrf.mxu0
  %v601 = vadd.f32 %v417, %v600
  %v602 = vpop.f32.mrf.mxu0
  %603 = vmatprep.mubr.f32.mxu0 0.0
  %604 = vmatmul.mubr.f32.gmra.mxu0 %v388
  %v605 = vpop.f32.mrf.mxu0
  %v606 = vadd.f32 %v417, %v605
  %v607 = vpop.f32.mrf.mxu0
  %608 = vmatprep.mubr.f32.mxu0 0.0
  %609 = vmatmul.mubr.f32.gmra.mxu0 %v389
  %v610 = vpop.f32.mrf.mxu0
  %v611 = vadd.f32 %v417, %v610
  %v612 = vpop.f32.mrf.mxu0
  %613 = vmatprep.mubr.f32.mxu0 0.0
  %614 = vmatmul.mubr.f32.gmra.mxu0 %v390
  %v615 = vpop.f32.mrf.mxu0
  %v616 = vadd.f32 %v417, %v615
  %v617 = vpop.f32.mrf.mxu0
  %618 = vmatprep.mubr.f32.mxu0 0.0
  %619 = vmatmul.mubr.f32.gmra.mxu0 %v391
  %v620 = vpop.f32.mrf.mxu0
  %v621 = vadd.f32 %v417, %v620
  %v622 = vpop.f32.mrf.mxu0
  %623 = vmatprep.mubr.f32.mxu0 0.0
  %624 = vmatmul.mubr.f32.gmra.mxu0 %v392
  %v625 = vpop.f32.mrf.mxu0
  %v626 = vadd.f32 %v417, %v625
  %v627 = vpop.f32.mrf.mxu0
  %628 = vmatprep.mubr.f32.mxu0 0.0
  %629 = vmatmul.mubr.f32.gmra.mxu0 %v393
  %v630 = vpop.f32.mrf.mxu0
  %v631 = vadd.f32 %v417, %v630
  %v632 = vpop.f32.mrf.mxu0
  %633 = vmatprep.mubr.f32.mxu0 0.0
  %634 = vmatmul.mubr.f32.gmra.mxu0 %v394
  %v635 = vpop.f32.mrf.mxu0
  %v636 = vadd.f32 %v417, %v635
  %v637 = vpop.f32.mrf.mxu0
  %638 = vmatprep.mubr.f32.mxu0 0.0
  %639 = vmatmul.mubr.f32.gmra.mxu0 %v395
  %v640 = vpop.f32.mrf.mxu0
  %v641 = vadd.f32 %v417, %v640
  %v642 = vpop.f32.mrf.mxu0
  %643 = vdwg.mxu0
  %vm644 = vcmp.gt.f32.partialorder %v486, 0.0
  %vm645 = vcmp.gt.f32.partialorder %v491, 0.0
  %vm646 = vcmp.gt.f32.partialorder %v496, 0.0
  %vm647 = vcmp.gt.f32.partialorder %v501, 0.0
  %vm648 = vcmp.gt.f32.partialorder %v506, 0.0
  %vm649 = vcmp.gt.f32.partialorder %v511, 0.0
  %vm650 = vcmp.gt.f32.partialorder %v516, 0.0
  %vm651 = vcmp.gt.f32.partialorder %v521, 0.0
  %vm652 = vcmp.gt.f32.partialorder %v526, 0.0
  %vm653 = vcmp.gt.f32.partialorder %v531, 0.0
  %vm654 = vcmp.gt.f32.partialorder %v536, 0.0
  %vm655 = vcmp.gt.f32.partialorder %v541, 0.0
  %vm656 = vcmp.gt.f32.partialorder %v546, 0.0
  %vm657 = vcmp.gt.f32.partialorder %v551, 0.0
  %vm658 = vcmp.gt.f32.partialorder %v556, 0.0
  %vm659 = vcmp.gt.f32.partialorder %v561, 0.0
  %vm660 = vcmp.gt.f32.partialorder %v566, 0.0
  %vm661 = vcmp.gt.f32.partialorder %v571, 0.0
  %vm662 = vcmp.gt.f32.partialorder %v576, 0.0
  %vm663 = vcmp.gt.f32.partialorder %v581, 0.0
  %vm664 = vcmp.gt.f32.partialorder %v586, 0.0
  %vm665 = vcmp.gt.f32.partialorder %v591, 0.0
  %vm666 = vcmp.gt.f32.partialorder %v596, 0.0
  %vm667 = vcmp.gt.f32.partialorder %v601, 0.0
  %vm668 = vcmp.gt.f32.partialorder %v606, 0.0
  %vm669 = vcmp.gt.f32.partialorder %v611, 0.0
  %vm670 = vcmp.gt.f32.partialorder %v616, 0.0
  %vm671 = vcmp.gt.f32.partialorder %v621, 0.0
  %vm672 = vcmp.gt.f32.partialorder %v626, 0.0
  %vm673 = vcmp.gt.f32.partialorder %v631, 0.0
  %vm674 = vcmp.gt.f32.partialorder %v636, 0.0
  %vm675 = vcmp.gt.f32.partialorder %v641, 0.0
  %v676 = vmul.f32 %v486, 0.1
  %v677 = vmul.f32 %v491, 0.1
  %v678 = vmul.f32 %v496, 0.1
  %v679 = vmul.f32 %v501, 0.1
  %v680 = vmul.f32 %v506, 0.1
  %v681 = vmul.f32 %v511, 0.1
  %v682 = vmul.f32 %v516, 0.1
  %v683 = vmul.f32 %v521, 0.1
  %v684 = vmul.f32 %v526, 0.1
  %v685 = vmul.f32 %v531, 0.1
  %v686 = vmul.f32 %v536, 0.1
  %v687 = vmul.f32 %v541, 0.1
  %v688 = vmul.f32 %v546, 0.1
  %v689 = vmul.f32 %v551, 0.1
  %v690 = vmul.f32 %v556, 0.1
  %v691 = vmul.f32 %v561, 0.1
  %v692 = vmul.f32 %v566, 0.1
  %v693 = vmul.f32 %v571, 0.1
  %v694 = vmul.f32 %v576, 0.1
  %v695 = vmul.f32 %v581, 0.1
  %v696 = vmul.f32 %v586, 0.1
  %v697 = vmul.f32 %v591, 0.1
  %v698 = vmul.f32 %v596, 0.1
  %v699 = vmul.f32 %v601, 0.1
  %v700 = vmul.f32 %v606, 0.1
  %v701 = vmul.f32 %v611, 0.1
  %v702 = vmul.f32 %v616, 0.1
  %v703 = vmul.f32 %v621, 0.1
  %v704 = vmul.f32 %v626, 0.1
  %v705 = vmul.f32 %v631, 0.1
  %v706 = vmul.f32 %v636, 0.1
  %v707 = vmul.f32 %v641, 0.1
  %v708 = vsel %vm644, %v486, %v676
  %v709 = vsel %vm645, %v491, %v677
  %v710 = vsel %vm646, %v496, %v678
  %v711 = vsel %vm647, %v501, %v679
  %v712 = vsel %vm648, %v506, %v680
  %v713 = vsel %vm649, %v511, %v681
  %v714 = vsel %vm650, %v516, %v682
  %v715 = vsel %vm651, %v521, %v683
  %v716 = vsel %vm652, %v526, %v684
  %v717 = vsel %vm653, %v531, %v685
  %v718 = vsel %vm654, %v536, %v686
  %v719 = vsel %vm655, %v541, %v687
  %v720 = vsel %vm656, %v546, %v688
  %v721 = vsel %vm657, %v551, %v689
  %v722 = vsel %vm658, %v556, %v690
  %v723 = vsel %vm659, %v561, %v691
  %v724 = vsel %vm660, %v566, %v692
  %v725 = vsel %vm661, %v571, %v693
  %v726 = vsel %vm662, %v576, %v694
  %v727 = vsel %vm663, %v581, %v695
  %v728 = vsel %vm664, %v586, %v696
  %v729 = vsel %vm665, %v591, %v697
  %v730 = vsel %vm666, %v596, %v698
  %v731 = vsel %vm667, %v601, %v699
  %v732 = vsel %vm668, %v606, %v700
  %v733 = vsel %vm669, %v611, %v701
  %v734 = vsel %vm670, %v616, %v702
  %v735 = vsel %vm671, %v621, %v703
  %v736 = vsel %vm672, %v626, %v704
  %v737 = vsel %vm673, %v631, %v705
  %v738 = vsel %vm674, %v636, %v706
  %v739 = vsel %vm675, %v641, %v707
  %v740 = vld [vmem:[%s6] sm:$0x1]
  %v742 = vlaneseq
  %v743 = vshrl.u32 %v742, 7
  %v744 = vsub.s32 0, %v743
  %v745 = vrot.slane %v740, %v744
  %v747 = vmul.f32 %v708, %v745
  %v748 = vmul.f32 %v709, %v745
  %v749 = vmul.f32 %v710, %v745
  %v750 = vmul.f32 %v711, %v745
  %v751 = vmul.f32 %v712, %v745
  %v752 = vmul.f32 %v713, %v745
  %v753 = vmul.f32 %v714, %v745
  %v754 = vmul.f32 %v715, %v745
  %v755 = vmul.f32 %v716, %v745
  %v756 = vmul.f32 %v717, %v745
  %v757 = vmul.f32 %v718, %v745
  %v758 = vmul.f32 %v719, %v745
  %v759 = vmul.f32 %v720, %v745
  %v760 = vmul.f32 %v721, %v745
  %v761 = vmul.f32 %v722, %v745
  %v762 = vmul.f32 %v723, %v745
  %v763 = vmul.f32 %v724, %v745
  %v764 = vmul.f32 %v725, %v745
  %v765 = vmul.f32 %v726, %v745
  %v766 = vmul.f32 %v727, %v745
  %v767 = vmul.f32 %v728, %v745
  %v768 = vmul.f32 %v729, %v745
  %v769 = vmul.f32 %v730, %v745
  %v770 = vmul.f32 %v731, %v745
  %v771 = vmul.f32 %v732, %v745
  %v772 = vmul.f32 %v733, %v745
  %v773 = vmul.f32 %v734, %v745
  %v774 = vmul.f32 %v735, %v745
  %v775 = vmul.f32 %v736, %v745
  %v776 = vmul.f32 %v737, %v745
  %v777 = vmul.f32 %v738, %v745
  %v778 = vmul.f32 %v739, %v745
  %779 = vadd.xlane.f32.xlu0 %v747
  %v780 = vpop.xlane.xlu0 %779
  %781 = vadd.xlane.f32.xlu0 %v748
  %v782 = vpop.xlane.xlu0 %781
  %783 = vadd.xlane.f32.xlu0 %v749
  %v784 = vpop.xlane.xlu0 %783
  %785 = vadd.xlane.f32.xlu0 %v750
  %v786 = vpop.xlane.xlu0 %785
  %787 = vadd.xlane.f32.xlu0 %v751
  %v788 = vpop.xlane.xlu0 %787
  %789 = vadd.xlane.f32.xlu0 %v752
  %v790 = vpop.xlane.xlu0 %789
  %791 = vadd.xlane.f32.xlu0 %v753
  %v792 = vpop.xlane.xlu0 %791
  %793 = vadd.xlane.f32.xlu0 %v754
  %v794 = vpop.xlane.xlu0 %793
  %795 = vadd.xlane.f32.xlu0 %v755
  %v796 = vpop.xlane.xlu0 %795
  %797 = vadd.xlane.f32.xlu0 %v756
  %v798 = vpop.xlane.xlu0 %797
  %799 = vadd.xlane.f32.xlu0 %v757
  %v800 = vpop.xlane.xlu0 %799
  %801 = vadd.xlane.f32.xlu0 %v758
  %v802 = vpop.xlane.xlu0 %801
  %803 = vadd.xlane.f32.xlu0 %v759
  %v804 = vpop.xlane.xlu0 %803
  %805 = vadd.xlane.f32.xlu0 %v760
  %v806 = vpop.xlane.xlu0 %805
  %807 = vadd.xlane.f32.xlu0 %v761
  %v808 = vpop.xlane.xlu0 %807
  %809 = vadd.xlane.f32.xlu0 %v762
  %v810 = vpop.xlane.xlu0 %809
  %811 = vadd.xlane.f32.xlu0 %v763
  %v812 = vpop.xlane.xlu0 %811
  %813 = vadd.xlane.f32.xlu0 %v764
  %v814 = vpop.xlane.xlu0 %813
  %815 = vadd.xlane.f32.xlu0 %v765
  %v816 = vpop.xlane.xlu0 %815
  %817 = vadd.xlane.f32.xlu0 %v766
  %v818 = vpop.xlane.xlu0 %817
  %819 = vadd.xlane.f32.xlu0 %v767
  %v820 = vpop.xlane.xlu0 %819
  %821 = vadd.xlane.f32.xlu0 %v768
  %v822 = vpop.xlane.xlu0 %821
  %823 = vadd.xlane.f32.xlu0 %v769
  %v824 = vpop.xlane.xlu0 %823
  %825 = vadd.xlane.f32.xlu0 %v770
  %v826 = vpop.xlane.xlu0 %825
  %827 = vadd.xlane.f32.xlu0 %v771
  %v828 = vpop.xlane.xlu0 %827
  %829 = vadd.xlane.f32.xlu0 %v772
  %v830 = vpop.xlane.xlu0 %829
  %831 = vadd.xlane.f32.xlu0 %v773
  %v832 = vpop.xlane.xlu0 %831
  %833 = vadd.xlane.f32.xlu0 %v774
  %v834 = vpop.xlane.xlu0 %833
  %835 = vadd.xlane.f32.xlu0 %v775
  %v836 = vpop.xlane.xlu0 %835
  %837 = vadd.xlane.f32.xlu0 %v776
  %v838 = vpop.xlane.xlu0 %837
  %839 = vadd.xlane.f32.xlu0 %v777
  %v840 = vpop.xlane.xlu0 %839
  %841 = vadd.xlane.f32.xlu0 %v778
  %v842 = vpop.xlane.xlu0 %841
  %s843 = sld [smem:[#allocation2]]
  %v844 = vstv %s843
  %v845 = vadd.f32 %v780, %v844
  %v846 = vadd.f32 %v782, %v844
  %v847 = vadd.f32 %v784, %v844
  %v848 = vadd.f32 %v786, %v844
  %v849 = vadd.f32 %v788, %v844
  %v850 = vadd.f32 %v790, %v844
  %v851 = vadd.f32 %v792, %v844
  %v852 = vadd.f32 %v794, %v844
  %v853 = vadd.f32 %v796, %v844
  %v854 = vadd.f32 %v798, %v844
  %v855 = vadd.f32 %v800, %v844
  %v856 = vadd.f32 %v802, %v844
  %v857 = vadd.f32 %v804, %v844
  %v858 = vadd.f32 %v806, %v844
  %v859 = vadd.f32 %v808, %v844
  %v860 = vadd.f32 %v810, %v844
  %v861 = vadd.f32 %v812, %v844
  %v862 = vadd.f32 %v814, %v844
  %v863 = vadd.f32 %v816, %v844
  %v864 = vadd.f32 %v818, %v844
  %v865 = vadd.f32 %v820, %v844
  %v866 = vadd.f32 %v822, %v844
  %v867 = vadd.f32 %v824, %v844
  %v868 = vadd.f32 %v826, %v844
  %v869 = vadd.f32 %v828, %v844
  %v870 = vadd.f32 %v830, %v844
  %v871 = vadd.f32 %v832, %v844
  %v872 = vadd.f32 %v834, %v844
  %v873 = vadd.f32 %v836, %v844
  %v874 = vadd.f32 %v838, %v844
  %v875 = vadd.f32 %v840, %v844
  %v876 = vadd.f32 %v842, %v844
  %v877 = vld [vmem:[%s1] sm:$0xff]
  %v878 = vld [vmem:[%s1 + $0x8] sm:$0xff]
  %v879 = vld [vmem:[%s1 + $0x10] sm:$0xff]
  %v880 = vld [vmem:[%s1 + $0x18] sm:$0xff]
  %v881 = vld [vmem:[%s1 + $0x20] sm:$0xff]
  %v882 = vld [vmem:[%s1 + $0x28] sm:$0xff]
  %v883 = vld [vmem:[%s1 + $0x30] sm:$0xff]
  %v884 = vld [vmem:[%s1 + $0x38] sm:$0xff]
  %v885 = vld [vmem:[%s1 + $0x40] sm:$0xff]
  %v886 = vld [vmem:[%s1 + $0x48] sm:$0xff]
  %v887 = vld [vmem:[%s1 + $0x50] sm:$0xff]
  %v888 = vld [vmem:[%s1 + $0x58] sm:$0xff]
  %v889 = vld [vmem:[%s1 + $0x60] sm:$0xff]
  %v890 = vld [vmem:[%s1 + $0x68] sm:$0xff]
  %v891 = vld [vmem:[%s1 + $0x70] sm:$0xff]
  %v892 = vld [vmem:[%s1 + $0x78] sm:$0xff]
  %v893 = vld [vmem:[%s1 + $0x80] sm:$0xff]
  %v894 = vld [vmem:[%s1 + $0x88] sm:$0xff]
  %v895 = vld [vmem:[%s1 + $0x90] sm:$0xff]
  %v896 = vld [vmem:[%s1 + $0x98] sm:$0xff]
  %v897 = vld [vmem:[%s1 + $0xa0] sm:$0xff]
  %v898 = vld [vmem:[%s1 + $0xa8] sm:$0xff]
  %v899 = vld [vmem:[%s1 + $0xb0] sm:$0xff]
  %v900 = vld [vmem:[%s1 + $0xb8] sm:$0xff]
  %v901 = vld [vmem:[%s1 + $0xc0] sm:$0xff]
  %v902 = vld [vmem:[%s1 + $0xc8] sm:$0xff]
  %v903 = vld [vmem:[%s1 + $0xd0] sm:$0xff]
  %v904 = vld [vmem:[%s1 + $0xd8] sm:$0xff]
  %v905 = vld [vmem:[%s1 + $0xe0] sm:$0xff]
  %v906 = vld [vmem:[%s1 + $0xe8] sm:$0xff]
  %v907 = vld [vmem:[%s1 + $0xf0] sm:$0xff]
  %v908 = vld [vmem:[%s1 + $0xf8] sm:$0xff]
  %v909 = vmul.f32 %v877, %v845
  %v910 = vmul.f32 %v878, %v846
  %v911 = vmul.f32 %v879, %v847
  %v912 = vmul.f32 %v880, %v848
  %v913 = vmul.f32 %v881, %v849
  %v914 = vmul.f32 %v882, %v850
  %v915 = vmul.f32 %v883, %v851
  %v916 = vmul.f32 %v884, %v852
  %v917 = vmul.f32 %v885, %v853
  %v918 = vmul.f32 %v886, %v854
  %v919 = vmul.f32 %v887, %v855
  %v920 = vmul.f32 %v888, %v856
  %v921 = vmul.f32 %v889, %v857
  %v922 = vmul.f32 %v890, %v858
  %v923 = vmul.f32 %v891, %v859
  %v924 = vmul.f32 %v892, %v860
  %v925 = vmul.f32 %v893, %v861
  %v926 = vmul.f32 %v894, %v862
  %v927 = vmul.f32 %v895, %v863
  %v928 = vmul.f32 %v896, %v864
  %v929 = vmul.f32 %v897, %v865
  %v930 = vmul.f32 %v898, %v866
  %v931 = vmul.f32 %v899, %v867
  %v932 = vmul.f32 %v900, %v868
  %v933 = vmul.f32 %v901, %v869
  %v934 = vmul.f32 %v902, %v870
  %v935 = vmul.f32 %v903, %v871
  %v936 = vmul.f32 %v904, %v872
  %v937 = vmul.f32 %v905, %v873
  %v938 = vmul.f32 %v906, %v874
  %v939 = vmul.f32 %v907, %v875
  %v940 = vmul.f32 %v908, %v876
  %vm941 = vcmask 7168
  %942 = vst.msk [vmem:[%s8] sm:$0xff] %vm941, %v909
  %943 = vst.msk [vmem:[%s8 + $0x8] sm:$0xff] %vm941, %v910
  %944 = vst.msk [vmem:[%s8 + $0x10] sm:$0xff] %vm941, %v911
  %945 = vst.msk [vmem:[%s8 + $0x18] sm:$0xff] %vm941, %v912
  %946 = vst.msk [vmem:[%s8 + $0x20] sm:$0xff] %vm941, %v913
  %947 = vst.msk [vmem:[%s8 + $0x28] sm:$0xff] %vm941, %v914
  %948 = vst.msk [vmem:[%s8 + $0x30] sm:$0xff] %vm941, %v915
  %949 = vst.msk [vmem:[%s8 + $0x38] sm:$0xff] %vm941, %v916
  %950 = vst.msk [vmem:[%s8 + $0x40] sm:$0xff] %vm941, %v917
  %951 = vst.msk [vmem:[%s8 + $0x48] sm:$0xff] %vm941, %v918
  %952 = vst.msk [vmem:[%s8 + $0x50] sm:$0xff] %vm941, %v919
  %953 = vst.msk [vmem:[%s8 + $0x58] sm:$0xff] %vm941, %v920
  %954 = vst.msk [vmem:[%s8 + $0x60] sm:$0xff] %vm941, %v921
  %955 = vst.msk [vmem:[%s8 + $0x68] sm:$0xff] %vm941, %v922
  %956 = vst.msk [vmem:[%s8 + $0x70] sm:$0xff] %vm941, %v923
  %957 = vst.msk [vmem:[%s8 + $0x78] sm:$0xff] %vm941, %v924
  %958 = vst.msk [vmem:[%s8 + $0x80] sm:$0xff] %vm941, %v925
  %959 = vst.msk [vmem:[%s8 + $0x88] sm:$0xff] %vm941, %v926
  %960 = vst.msk [vmem:[%s8 + $0x90] sm:$0xff] %vm941, %v927
  %961 = vst.msk [vmem:[%s8 + $0x98] sm:$0xff] %vm941, %v928
  %962 = vst.msk [vmem:[%s8 + $0xa0] sm:$0xff] %vm941, %v929
  %963 = vst.msk [vmem:[%s8 + $0xa8] sm:$0xff] %vm941, %v930
  %964 = vst.msk [vmem:[%s8 + $0xb0] sm:$0xff] %vm941, %v931
  %965 = vst.msk [vmem:[%s8 + $0xb8] sm:$0xff] %vm941, %v932
  %966 = vst.msk [vmem:[%s8 + $0xc0] sm:$0xff] %vm941, %v933
  %967 = vst.msk [vmem:[%s8 + $0xc8] sm:$0xff] %vm941, %v934
  %968 = vst.msk [vmem:[%s8 + $0xd0] sm:$0xff] %vm941, %v935
  %969 = vst.msk [vmem:[%s8 + $0xd8] sm:$0xff] %vm941, %v936
  %970 = vst.msk [vmem:[%s8 + $0xe0] sm:$0xff] %vm941, %v937
  %971 = vst.msk [vmem:[%s8 + $0xe8] sm:$0xff] %vm941, %v938
  %972 = vst.msk [vmem:[%s8 + $0xf0] sm:$0xff] %vm941, %v939
  %973 = vst.msk [vmem:[%s8 + $0xf8] sm:$0xff] %vm941, %v940
  // Predicated region
  $region34: #{tpu_custom_call.1} parent=0 // pred_check
    _
  $region35: #{tpu_custom_call.1} parent=0 // pred_check_branch
    %975 = sbr.rel (0) target = $region37
  $region36: #{tpu_custom_call.1} parent=0 // pred_region
    _
  $region37: #{tpu_custom_call.1} parent=0 // pred_fallthru
    _
  // Predicated region
  $region38: #{tpu_custom_call.1} parent=0 // pred_check
    _
  $region39: #{tpu_custom_call.1} parent=0 // pred_check_branch
    %977 = sbr.rel (0) target = $region41
  $region40: #{tpu_custom_call.1} parent=0 // pred_region
    _
  $region41: #{tpu_custom_call.1} parent=0 // pred_fallthru
    _

</llo_original>
